<compile_context>
chip_gen: v6e
topology: v6e:2x2x1
jax: 0.10.0
libtpu: 0.0.40
codegen_flags: <defaults>
</compile_context>

<pallas_src>
import jax
import jax.numpy as jnp
from jax import lax
from jax.experimental import pallas as pl
from jax.experimental.pallas import tpu as pltpu


def _round_up(n, m):
    return ((n + m - 1) // m) * m


def _vmem_capacity_bytes():
    """Physical VMEM per TensorCore (v5e/v6e: 128 MiB, v7x: 64 MiB)."""
    try:
        cap = getattr(pltpu.get_tpu_info(), "vmem_capacity_bytes", None)
        if cap:
            return int(cap)
    except Exception:
        pass
    return 64 * 1024 * 1024  # conservative default (v7x per-TC)


# -----------------------------------------------------------------------------
# Kernel
# -----------------------------------------------------------------------------
def reward_model_kernel(x_ref, w1t_ref, bw_ref, b2_ref, o_ref):
    # x_ref  : [TILE_B, d_in]   streamed batch tile (double/triple buffered)
    # w1t_ref: [H_pad, d_in]    resident Linear1 weight (already transposed)
    # bw_ref : [H_pad, 2]       resident: column 0 = b1, column 1 = w2
    # b2_ref : [1]  (SMEM)      Linear2 bias (scalar)
    # o_ref  : [1, TILE_B]      lane-dense output row

    # Hidden layer on the MXU with the batch on lanes:
    #   h[H_pad, TILE_B] = w1t[H_pad, d_in] . x[TILE_B, d_in]^T
    # (dot_general contracting d_in on both operands; f32 accumulation).
    h = lax.dot_general(
        w1t_ref[...], x_ref[...],
        dimension_numbers=(((1,), (1,)), ((), ())),
        preferred_element_type=jnp.float32,
    )
    bw = bw_ref[...]                                     # [H_pad, 2] f32
    h = jnp.maximum(h + bw[:, 0:1], 0.0)                 # + b1, ReLU   (VPU)
    # Width-1 output layer: VPU multiply + sublane reduce (free XLU slot),
    # giving a naturally lane-dense [1, TILE_B] row.
    out = jnp.sum(h * bw[:, 1:2], axis=0, keepdims=True)
    o_ref[...] = (out + b2_ref[0]).astype(o_ref.dtype)


# -----------------------------------------------------------------------------
# One-time parameter prep (hoisted out of the forward path)
# -----------------------------------------------------------------------------
def prepare_params(w1, b1, w2, b2, compute_dtype=jnp.float32):
    """w1: [d_in, H], b1: [H], w2: [H, 1], b2: [1].

    compute_dtype controls the streamed x / resident w1^T dtype (f32 or bf16);
    post-matmul math stays f32 (MXU accumulates in f32).
    """
    d_in, H = w1.shape
    sub = 16 if jnp.dtype(compute_dtype).itemsize == 2 else 8
    H_pad = _round_up(H, sub)
    pad_h = H_pad - H
    w1t = jnp.pad(jnp.asarray(w1, jnp.float32).T, ((0, pad_h), (0, 0)))
    b1c = jnp.pad(jnp.asarray(b1, jnp.float32).reshape(H, 1), ((0, pad_h), (0, 0)))
    w2c = jnp.pad(jnp.asarray(w2, jnp.float32).reshape(H, 1), ((0, pad_h), (0, 0)))
    return dict(
        w1t=w1t.astype(compute_dtype),                   # [H_pad, d_in]
        bw=jnp.concatenate([b1c, w2c], axis=1),          # [H_pad, 2] f32
        b2=jnp.asarray(b2, jnp.float32).reshape(1),
        d_in=int(d_in), H=int(H), H_pad=int(H_pad),
        compute_dtype=jnp.dtype(compute_dtype),
    )


def _xla_forward(x, params):
    """Small-batch fallback: plain XLA GEMM (no Pallas fixed cost)."""
    xc = x.astype(params["compute_dtype"])
    bw = params["bw"]
    h = jnp.maximum(
        jnp.dot(xc, params["w1t"].T, preferred_element_type=jnp.float32) + bw[:, 0],
        0.0)
    return (jnp.dot(h, bw[:, 1:2], preferred_element_type=jnp.float32)
            + params["b2"]).astype(jnp.float32)


# -----------------------------------------------------------------------------
# Forward
# -----------------------------------------------------------------------------
def reward_model_forward(x, params, *, min_pallas_batch=256):
    """x: [B, input_dim] -> logits [B, 1] f32 (PyTorch nn.Linear semantics)."""
    B, d_in = x.shape
    assert d_in == params["d_in"]
    H_pad = params["H_pad"]
    compute_dtype = params["compute_dtype"]
    x_bytes = compute_dtype.itemsize

    if B < min_pallas_batch:
        return _xla_forward(x, params)

    x = x.astype(compute_dtype)

    # --- VMEM-budget-driven batch tiling (the roofline knob) -----------------
    vmem_cap = _vmem_capacity_bytes()
    budget = min(vmem_cap // 3, 24 * 1024 * 1024)     # fits v7x; v5e/v6e get full tiles
    per_row = 2 * d_in * x_bytes + 4 * H_pad + 8      # dbl-buffered x + h + out
    tile_b = max(128, min(8192, budget // per_row))
    tile_b = (tile_b // 128) * 128                    # lane-dense output row
    # Force >=2 grid steps for big batches so "parallel" can shard across
    # v7x's two TensorCores (harmless on single-TC chips).
    if B >= 1024:
        tile_b = min(tile_b, _round_up(-(-B // 2), 128))
    if B <= tile_b:
        # Single-tile batch: only round to a legal sublane multiple.
        mult = 16 if x_bytes == 2 else 8
        tile_b = _round_up(max(B, mult), mult)
    # TODO(synk): for very large d_in (>~8-16K) add an inner "arbitrary" K grid
    # axis over d_in with an f32 VMEM scratch accumulator instead of letting
    # tile_b shrink toward 128.

    b_pad = _round_up(B, tile_b)
    if b_pad != B:
        x = jnp.pad(x, ((0, b_pad - B), (0, 0)))
    num_tiles = b_pad // tile_b
    grid = (num_tiles,)

    # Triple-buffer x only when steps are tiny and numerous enough that DMA
    # latency (not bandwidth) is the exposed cost.
    x_tile_bytes = tile_b * d_in * x_bytes
    n_buf = 3 if (num_tiles >= 4 and x_tile_bytes < (512 << 10)) else 2
    if n_buf == 3:
        x_spec = pl.BlockSpec((tile_b, d_in), lambda i: (i, 0),
                              pipeline_mode=pl.Buffered(3))
    else:
        x_spec = pl.BlockSpec((tile_b, d_in), lambda i: (i, 0))

    # Scoped VMEM limit: cover pipeline buffers with headroom (v5e default is
    # only 16 MiB and would otherwise gate large tiles); never exceed physical.
    w_bytes = jnp.dtype(params["w1t"].dtype).itemsize
    vmem_est = (n_buf * x_tile_bytes
                + tile_b * H_pad * 4                      # h intermediate
                + 2 * H_pad * d_in * w_bytes              # resident w1^T
                + 2 * H_pad * 2 * 4 + 2 * tile_b * 4      # bw + output row
                + (256 << 10))
    vmem_limit = min(max(32 << 20, vmem_est * 3 // 2), vmem_cap * 9 // 10)

    cost = pl.CostEstimate(
        flops=2 * b_pad * d_in * H_pad + 3 * b_pad * H_pad,
        transcendentals=0,
        bytes_accessed=(b_pad * d_in * x_bytes + H_pad * d_in * w_bytes
                        + (2 * H_pad + 1) * 4 + b_pad * 4),
    )

    out_row = pl.pallas_call(
        reward_model_kernel,
        out_shape=jax.ShapeDtypeStruct((1, b_pad), jnp.float32),
        grid=grid,
        in_specs=[
            x_spec,                                              # x: streamed
            pl.BlockSpec((H_pad, d_in), lambda i: (0, 0)),       # w1^T: resident
            pl.BlockSpec((H_pad, 2), lambda i: (0, 0)),          # [b1 | w2]: resident
            pl.BlockSpec(memory_space=pltpu.MemorySpace.SMEM),   # b2 scalar
        ],
        out_specs=pl.BlockSpec((1, tile_b), lambda i: (0, i)),   # lane-dense row
        compiler_params=pltpu.CompilerParams(
            dimension_semantics=("parallel",),                   # shard over TCs
            vmem_limit_bytes=int(vmem_limit),
        ),
        cost_estimate=cost,
    )(x, params["w1t"], params["bw"], params["b2"])

    # Back to the PyTorch [B, 1] layout (free layout plumbing in the wrapper).
    return out_row[0, :B].reshape(B, 1)


def init_params(key, input_dim, hidden_dim):
    """Deterministic init mimicking nn.Linear (uniform in +-1/sqrt(fan_in))."""
    k1, k2, k3, k4 = jax.random.split(key, 4)
    lim1 = 1.0 / jnp.sqrt(input_dim)
    lim2 = 1.0 / jnp.sqrt(hidden_dim)
    w1 = jax.random.uniform(k1, (input_dim, hidden_dim), jnp.float32, -lim1, lim1)
    b1 = jax.random.uniform(k2, (hidden_dim,), jnp.float32, -lim1, lim1)
    w2 = jax.random.uniform(k3, (hidden_dim, 1), jnp.float32, -lim2, lim2)
    b2 = jax.random.uniform(k4, (1,), jnp.float32, -lim2, lim2)
    return w1, b1, w2, b2


if __name__ == "__main__":
    key = jax.random.PRNGKey(0)
    k_x, k_xl, k_p = jax.random.split(key, 3)

    input_dim, hidden_dim = 16, 32
    w1, b1, w2, b2 = init_params(k_p, input_dim, hidden_dim)
    params = prepare_params(w1, b1, w2, b2)          # hoisted one-time prep

    def ref_forward(xv):
        return jnp.maximum(xv @ w1 + b1, 0.0) @ w2 + b2

    # Small batch, forcing the Pallas path (single-tile case).
    x_small = jax.random.normal(k_x, (8, input_dim), dtype=jnp.float32)
    y_small = jax.block_until_ready(
        reward_model_forward(x_small, params, min_pallas_batch=0))
    assert y_small.shape == (8, 1)
    assert jnp.allclose(y_small, ref_forward(x_small), atol=1e-4, rtol=1e-4)

    # Small batch, default settings -> XLA fallback path.
    y_fb = jax.block_until_ready(reward_model_forward(x_small, params))
    assert jnp.allclose(y_fb, ref_forward(x_small), atol=1e-4, rtol=1e-4)

    # Larger batch: exercises the multi-tile (>=2-step, "parallel") grid.
    x_large = jax.random.normal(k_xl, (1024, input_dim), dtype=jnp.float32)
    y_large = jax.block_until_ready(reward_model_forward(x_large, params))
    assert y_large.shape == (1024, 1)
    assert jnp.allclose(y_large, ref_forward(x_large), atol=1e-4, rtol=1e-4)

    print("KERNEL_OK")
</pallas_src>

<mosaic_0001>
module attributes {stable_mosaic.version = 11 : i64} {
  func.func @reward_model_kernel(%arg0: i32, %arg1: memref<8x16xf32, #tpu.memory_space<vmem>>, %arg2: memref<32x16xf32, #tpu.memory_space<vmem>>, %arg3: memref<32x2xf32, #tpu.memory_space<vmem>>, %arg4: memref<1xf32, #tpu.memory_space<smem>>, %arg5: memref<1x8xf32, #tpu.memory_space<vmem>>) attributes {dimension_semantics = [#tpu.dimension_semantics<parallel>], iteration_bounds = array<i64: 1>, scalar_prefetch = 0 : i64, scratch_operands = 0 : i64, tpu.core_type = #tpu.core_type<tc>, window_params = [{transform_indices = @transform_0, window_bounds = array<i64: 8, 16>}, {pipeline_mode = #tpu.pipeline_mode<synchronous>, transform_indices = @transform_1, window_bounds = array<i64: 32, 16>}, {pipeline_mode = #tpu.pipeline_mode<synchronous>, transform_indices = @transform_2, window_bounds = array<i64: 32, 2>}, {transform_indices = @transform_3, window_bounds = array<i64: 1>}, {transform_indices = @transform_4, window_bounds = array<i64: 1, 8>}]} {
    %c0 = arith.constant 0 : index
    %c0_0 = arith.constant 0 : index
    %0 = vector.load %arg2[%c0, %c0_0] : memref<32x16xf32, #tpu.memory_space<vmem>>, vector<32x16xf32>
    %c0_1 = arith.constant 0 : index
    %c0_2 = arith.constant 0 : index
    %1 = vector.load %arg1[%c0_1, %c0_2] : memref<8x16xf32, #tpu.memory_space<vmem>>, vector<8x16xf32>
    %cst = arith.constant dense<0.000000e+00> : vector<32x8xf32>
    %2 = tpu.matmul %0, %1, %cst {dimension_numbers = #tpu.dot_dimension_numbers<[1], [1], [0], [0], [0, 0, 1, 0], [], []>} : vector<32x16xf32>, vector<8x16xf32>, vector<32x8xf32> -> vector<32x8xf32>
    %c0_3 = arith.constant 0 : index
    %c0_4 = arith.constant 0 : index
    %3 = vector.load %arg3[%c0_3, %c0_4] : memref<32x2xf32, #tpu.memory_space<vmem>>, vector<32x2xf32>
    %4 = vector.extract_strided_slice %3 {offsets = [0, 0], sizes = [32, 1], strides = [1, 1]} : vector<32x2xf32> to vector<32x1xf32>
    %5 = vector.broadcast %4 : vector<32x1xf32> to vector<32x8xf32>
    %6 = arith.addf %2, %5 : vector<32x8xf32>
    %cst_5 = arith.constant 0.000000e+00 : f32
    %7 = vector.broadcast %cst_5 : f32 to vector<32x8xf32>
    %8 = arith.maximumf %6, %7 : vector<32x8xf32>
    %9 = vector.extract_strided_slice %3 {offsets = [0, 1], sizes = [32, 1], strides = [1, 1]} : vector<32x2xf32> to vector<32x1xf32>
    %10 = vector.broadcast %9 : vector<32x1xf32> to vector<32x8xf32>
    %11 = arith.mulf %8, %10 : vector<32x8xf32>
    %cst_6 = arith.constant dense<0.000000e+00> : vector<8xf32>
    %12 = vector.multi_reduction <add>, %11, %cst_6 [0] : vector<32x8xf32> to vector<8xf32>
    %13 = vector.shape_cast %12 : vector<8xf32> to vector<1x8xf32>
    %c0_7 = arith.constant 0 : index
    %14 = memref.load %arg4[%c0_7] : memref<1xf32, #tpu.memory_space<smem>>
    %15 = vector.broadcast %14 : f32 to vector<1x8xf32>
    %16 = arith.addf %13, %15 : vector<1x8xf32>
    %c0_8 = arith.constant 0 : index
    %c0_9 = arith.constant 0 : index
    %17 = vector.load %arg5[%c0_8, %c0_9] : memref<1x8xf32, #tpu.memory_space<vmem>>, vector<1x8xf32>
    tpu.vector_store %arg5[%c0_8, %c0_9], %16 {strides = array<i32>} : memref<1x8xf32, #tpu.memory_space<vmem>>, vector<1x8xf32>,
    return
  }
  func.func @transform_0(%arg0: i32) -> (i32, i32) {
    %c0_i32 = arith.constant 0 : i32
    %c0_i32_0 = arith.constant 0 : i32
    return %arg0, %c0_i32 : i32, i32
  }
  func.func @transform_1(%arg0: i32) -> (i32, i32) {
    %c0_i32 = arith.constant 0 : i32
    %c0_i32_0 = arith.constant 0 : i32
    %c0_i32_1 = arith.constant 0 : i32
    return %c0_i32, %c0_i32_0 : i32, i32
  }
  func.func @transform_2(%arg0: i32) -> (i32, i32) {
    %c0_i32 = arith.constant 0 : i32
    %c0_i32_0 = arith.constant 0 : i32
    %c0_i32_1 = arith.constant 0 : i32
    return %c0_i32, %c0_i32_0 : i32, i32
  }
  func.func @transform_3(%arg0: i32) -> i32 {
    %c0_i32 = arith.constant 0 : i32
    %c0_i32_0 = arith.constant 0 : i32
    return %c0_i32 : i32
  }
  func.func @transform_4(%arg0: i32) -> (i32, i32) {
    %c0_i32 = arith.constant 0 : i32
    %c0_i32_0 = arith.constant 0 : i32
    return %c0_i32, %arg0 : i32, i32
  }
}

</mosaic_0001>

<llo_original>
// kernel: tpu_custom_call.1
$region0: #{tpu_custom_call.1}
  #allocation0 [shape = 'u32[]', space=smem, size = 0x4, offset = 0x4, fixed_abs, tag = 'smem constant byte address 0x4 - core index']
  #allocation1 [shape = 'u32[144,128]{1,0:T(1,128)}', space=vmem, size = 0x12000, scoped, tag = 'internal scratch']
  #allocation2 [shape = 'f32[1]{0:T(128)S(6)}', space=smem, size = 0x200, scoped, tag = 'scoped memory for tpu_custom_call.1']
  %s0 = inlined_call_operand.vmem [shape: f32[8,16], index: 0, kind: input, shape index: {}]
  %s1 = inlined_call_operand.vmem [shape: f32[32,16], index: 1, kind: input, shape index: {}]
  %s2 = inlined_call_operand.vmem [shape: f32[32,2], index: 2, kind: input, shape index: {}]
  %s3 = inlined_call_operand.<no memory space> [shape: f32[1], index: 3, kind: input, shape index: {}]
  %s4 = inlined_call_operand.hbm [shape: f32[1,8], index: 4, kind: output, shape index: {}]
  %s5 = sld [smem:[#allocation0]]
  $region26: #{tpu_custom_call.1} parent=0
    _
  %s7 = ssub.s32 1, %s5
  %s8 = scalar_select 0, %s7, %s5
  %9 = sst [smem:[#allocation2]] %s3
  $region1: #{tpu_custom_call.1} parent=0
    #allocation3 [shape = 'u8[512]{0}', space=vmem, size = 0x400, scoped, tag = 'output window, operand 0, single buffered']
    #allocation4 [shape = 's32[1]{0}', space=sflag, size = 0x4, scoped, tag = 'scoped memory for tpu_custom_call.1']
    %10 = vsyncpa [#allocation4], 0
    // Predicated region
    $region2: #{tpu_custom_call.1} parent=1 // pred_check
      _
    $region3: #{tpu_custom_call.1} parent=1 // pred_check_branch
      %12 = sbr.rel (0) target = $region5
    $region4: #{tpu_custom_call.1} parent=1 // pred_region
      _
    $region5: #{tpu_custom_call.1} parent=1 // pred_fallthru
      _
    // Predicated region
    $region6: #{tpu_custom_call.1} parent=1 // pred_check
      _
    $region7: #{tpu_custom_call.1} parent=1 // pred_check_branch
      %14 = sbr.rel (0) target = $region9
    $region8: #{tpu_custom_call.1} parent=1 // pred_region
      _
    $region9: #{tpu_custom_call.1} parent=1 // pred_fallthru
      _
    // Predicated region
    $region10: #{tpu_custom_call.1} parent=1 // pred_check
      _
    $region11: #{tpu_custom_call.1} parent=1 // pred_check_branch
      %16 = sbr.rel (0) target = $region13
    $region12: #{tpu_custom_call.1} parent=1 // pred_region
      _
    $region13: #{tpu_custom_call.1} parent=1 // pred_fallthru
      _
    // Predicated region
    $region14: #{tpu_custom_call.1} parent=1 // pred_check
      _
    $region15: #{tpu_custom_call.1} parent=1 // pred_check_branch
      %18 = sbr.rel (0) target = $region17
    $region16: #{tpu_custom_call.1} parent=1 // pred_region
      _
    $region17: #{tpu_custom_call.1} parent=1 // pred_fallthru
      _
    %v19 = vld [vmem:[%s1] sm:$0xff]
    %v20 = vld [vmem:[%s1 + $0x8] sm:$0xff]
    %v21 = vld [vmem:[%s1 + $0x10] sm:$0xff]
    %v22 = vld [vmem:[%s1 + $0x18] sm:$0xff]
    %v23 = vld [vmem:[%s0] sm:$0xff]
    %v24 = vld [vmem:[%s2] sm:$0xff]
    %v25 = vld [vmem:[%s2 + $0x8] sm:$0xff]
    %v26 = vld [vmem:[%s2 + $0x10] sm:$0xff]
    %v27 = vld [vmem:[%s2 + $0x18] sm:$0xff]
    %29 = vset.pattern.permute.xlu0 0
    %30 = vperm.xlu0 %29, %v24
    %v31 = vpop.permute.xlu0 %30
    %34 = vset.pattern.permute.xlu0 0
    %35 = vperm.xlu0 %34, %v25
    %v36 = vpop.permute.xlu0 %35
    %39 = vset.pattern.permute.xlu0 0
    %40 = vperm.xlu0 %39, %v26
    %v41 = vpop.permute.xlu0 %40
    %44 = vset.pattern.permute.xlu0 0
    %45 = vperm.xlu0 %44, %v27
    %v46 = vpop.permute.xlu0 %45
    %vm48 = vcmask 130048
    %v50 = vsel %vm48, %v19, 0
    %v53 = vsel %vm48, %v20, 0
    %v56 = vsel %vm48, %v21, 0
    %v59 = vsel %vm48, %v22, 0
    %v62 = vsel %vm48, %v23, 0
    %64 = vmatprep.subr.mxu0 0.0
    %65 = vmatpush1.xpose.msra.mxu0 0.0
    %66 = vmatprep.subr.mxu0 0.0
    %67 = vmatpush1.xpose.msra.mxu0 0.0
    %68 = vmatprep.subr.mxu0 0.0
    %69 = vmatpush1.xpose.msra.mxu0 0.0
    %70 = vmatprep.subr.mxu0 0.0
    %71 = vmatpush1.xpose.msra.mxu0 0.0
    %72 = vmatprep.subr.mxu0 0.0
    %73 = vmatpush1.xpose.msra.mxu0 0.0
    %74 = vmatprep.subr.mxu0 0.0
    %75 = vmatpush1.xpose.msra.mxu0 0.0
    %76 = vmatprep.subr.mxu0 0.0
    %77 = vmatpush1.xpose.msra.mxu0 0.0
    %78 = vmatprep.subr.mxu0 0.0
    %79 = vmatpush1.xpose.msra.mxu0 0.0
    %80 = vmatprep.subr.mxu0 0.0
    %81 = vmatpush1.xpose.msra.mxu0 0.0
    %82 = vmatprep.subr.mxu0 0.0
    %83 = vmatpush1.xpose.msra.mxu0 0.0
    %84 = vmatprep.subr.mxu0 0.0
    %85 = vmatpush1.xpose.msra.mxu0 0.0
    %86 = vmatprep.subr.mxu0 0.0
    %87 = vmatpush1.xpose.msra.mxu0 0.0
    %88 = vmatprep.subr.mxu0 0.0
    %89 = vmatpush1.xpose.msra.mxu0 0.0
    %90 = vmatprep.subr.mxu0 0.0
    %91 = vmatpush1.xpose.msra.mxu0 0.0
    %92 = vmatprep.subr.mxu0 0.0
    %93 = vmatpush1.xpose.msra.mxu0 0.0
    %94 = vmatprep.subr.mxu0 0.0
    %95 = vmatpush1.xpose.msra.mxu0 %v62
    %96 = vmatprep.subr.mxu0 0.0
    %97 = vmatpush2.xpose.msra.mxu0 0.0
    %98 = vmatprep.subr.mxu0 0.0
    %99 = vmatpush2.xpose.msra.mxu0 0.0
    %100 = vmatprep.subr.mxu0 0.0
    %101 = vmatpush2.xpose.msra.mxu0 0.0
    %102 = vmatprep.subr.mxu0 0.0
    %103 = vmatpush2.xpose.msra.mxu0 0.0
    %104 = vmatprep.subr.mxu0 0.0
    %105 = vmatpush2.xpose.msra.mxu0 0.0
    %106 = vmatprep.subr.mxu0 0.0
    %107 = vmatpush2.xpose.msra.mxu0 0.0
    %108 = vmatprep.subr.mxu0 0.0
    %109 = vmatpush2.xpose.msra.mxu0 0.0
    %110 = vmatprep.subr.mxu0 0.0
    %111 = vmatpush2.xpose.msra.mxu0 0.0
    %112 = vmatprep.subr.mxu0 0.0
    %113 = vmatpush2.xpose.msra.mxu0 0.0
    %114 = vmatprep.subr.mxu0 0.0
    %115 = vmatpush2.xpose.msra.mxu0 0.0
    %116 = vmatprep.subr.mxu0 0.0
    %117 = vmatpush2.xpose.msra.mxu0 0.0
    %118 = vmatprep.subr.mxu0 0.0
    %119 = vmatpush2.xpose.msra.mxu0 0.0
    %120 = vmatprep.subr.mxu0 0.0
    %121 = vmatpush2.xpose.msra.mxu0 0.0
    %122 = vmatprep.subr.mxu0 0.0
    %123 = vmatpush2.xpose.msra.mxu0 0.0
    %124 = vmatprep.subr.mxu0 0.0
    %125 = vmatpush2.xpose.msra.mxu0 0.0
    %126 = vmatprep.subr.mxu0 0.0
    %127 = vmatpush2.xpose.msra.mxu0 0.0
    %128 = vmatprep.mubr.f32.mxu0 0.0
    %129 = vmatmul.mubr.f32.gmra.mxu0 %v50
    %v130 = vpop.f32.mrf.mxu0
    %v131 = vadd.f32 %v31, %v130
    %v132 = vpop.f32.mrf.mxu0
    %133 = vmatprep.mubr.f32.mxu0 0.0
    %134 = vmatmul.mubr.f32.gmra.mxu0 %v53
    %v135 = vpop.f32.mrf.mxu0
    %v136 = vadd.f32 %v36, %v135
    %v137 = vpop.f32.mrf.mxu0
    %138 = vmatprep.mubr.f32.mxu0 0.0
    %139 = vmatmul.mubr.f32.gmra.mxu0 %v56
    %v140 = vpop.f32.mrf.mxu0
    %v141 = vadd.f32 %v41, %v140
    %v142 = vpop.f32.mrf.mxu0
    %143 = vmatprep.mubr.f32.mxu0 0.0
    %144 = vmatmul.mubr.f32.gmra.mxu0 %v59
    %v145 = vpop.f32.mrf.mxu0
    %v146 = vadd.f32 %v46, %v145
    %v147 = vpop.f32.mrf.mxu0
    %148 = vdwg.mxu0
    %v149 = vmax.f32 %v131, 0.0
    %v150 = vmax.f32 %v136, 0.0
    %v151 = vmax.f32 %v141, 0.0
    %v152 = vmax.f32 %v146, 0.0
    %153 = vset.pattern.permute.xlu0 1
    %154 = vperm.xlu0 %153, %v24
    %v155 = vpop.permute.xlu0 %154
    %157 = vset.pattern.permute.xlu0 1
    %158 = vperm.xlu0 %157, %v25
    %v159 = vpop.permute.xlu0 %158
    %161 = vset.pattern.permute.xlu0 1
    %162 = vperm.xlu0 %161, %v26
    %v163 = vpop.permute.xlu0 %162
    %165 = vset.pattern.permute.xlu0 1
    %166 = vperm.xlu0 %165, %v27
    %v167 = vpop.permute.xlu0 %166
    %v169 = vmul.f32 %v149, %v155
    %v170 = vmul.f32 %v150, %v159
    %v171 = vmul.f32 %v151, %v163
    %v172 = vmul.f32 %v152, %v167
    %vm173 = vcmask 64512
    %v174 = vsel %vm173, %v169, 0.0
    %v175 = vsel %vm173, %v170, 0.0
    %v176 = vadd.f32 %v174, %v175
    %v177 = vsel %vm173, %v171, 0.0
    %v178 = vadd.f32 %v176, %v177
    %v179 = vsel %vm173, %v172, 0.0
    %v180 = vadd.f32 %v178, %v179
    %v181 = vrot.slane %v180, 4
    %v182 = vadd.f32 %v180, %v181
    %v183 = vrot.slane %v182, 2
    %v184 = vadd.f32 %v182, %v183
    %v185 = vrot.slane %v184, 1
    %v186 = vadd.f32 %v184, %v185
    %s187 = sld [smem:[#allocation2]]
    %v188 = vstv %s187
    %v189 = vadd.f32 %v186, %v188
    %vm190 = vcmask 57344
    %191 = vst.msk [vmem:[#allocation3] sm:$0x1] %vm190, %v189
    // Predicated region
    $region18: #{tpu_custom_call.1} parent=1 // pred_check
      _
    $region19: #{tpu_custom_call.1} parent=1 // pred_check_branch
      %193 = sbr.rel (0) target = $region21
    $region20: #{tpu_custom_call.1} parent=1 // pred_region
      %s195 = ssub.s32 16, 16
      %196 = vsyncadd [#allocation4], %s195
      %s198 = sshll.u32 [#allocation3], 4
      %s199 = int_to_ptr.vmem [resolvable:$true] %s198
      %201 = dma.vmem_to_hbm [thread:$0]  %s199, 16, %s4, [#allocation4]
    $region21: #{tpu_custom_call.1} parent=1 // pred_fallthru
      _
    // Predicated region
    $region22: #{tpu_custom_call.1} parent=1 // pred_check
      _
    $region23: #{tpu_custom_call.1} parent=1 // pred_check_branch
      %203 = sbr.rel (0) target = $region25
    $region24: #{tpu_custom_call.1} parent=1 // pred_region
      %204 = dma.done [#allocation4], 16
    $region25: #{tpu_custom_call.1} parent=1 // pred_fallthru
      _
    %205 = vsyncpa [#allocation4], 1

</llo_original>
